<compile_context>
chip_gen: v6e
topology: v6e:2x2x1
jax: 0.10.0
libtpu: 0.0.40
codegen_flags: <defaults>
</compile_context>

<pallas_src>
import jax
import jax.numpy as jnp
from jax.experimental import pallas as pl
from jax.experimental.pallas import tpu as pltpu


def _round_up(x, m):
    return ((x + m - 1) // m) * m


def _matmul_bias_kernel(x_ref, w_ref, b_ref, o_ref):
    """One fused, lane-dense MXU matmul per grid step.

    x_ref: (tile_rows, Kg)   packed im2col patches (G output pixels per row)
    w_ref: (Kg, CP)          block-diagonal fused complex weight
    b_ref: (1, CP)           fused bias, tiled per packed pixel
    o_ref: (tile_rows, CP)   packed [real|imag] outputs, 128-lane dense
    """
    acc = jnp.dot(x_ref[...], w_ref[...], preferred_element_type=jnp.float32)
    o_ref[...] = (acc + b_ref[...]).astype(o_ref.dtype)


def complex_conv2d(x_real, x_imag, w_r, w_i, b_r, b_i, *, stride=1, padding=0,
                   tile_rows=1024, compute_dtype=jnp.float32):
    """ComplexConv2d forward.

    x_*: (N, C_in, H, W) float32 real/imag planes; w_*: (C_out, C_in, KH, KW);
    b_*: (C_out,).  Returns (N, C_out, H_out, W_out) complex64.
    """
    N, C_in, H, W = x_real.shape
    C_out, _, KH, KW = w_r.shape

    if padding:
        pad = ((0, 0), (0, 0), (padding, padding), (padding, padding))
        x_real = jnp.pad(x_real, pad)
        x_imag = jnp.pad(x_imag, pad)
        H += 2 * padding
        W += 2 * padding

    H_out = (H - KH) // stride + 1
    W_out = (W - KW) // stride + 1
    M = H_out * W_out                       # valid output pixels (stride applied)

    C2 = 2 * C_in                           # fused real|imag input channels
    K2 = KH * KW * C2                       # contraction depth per pixel
    c2 = 2 * C_out                          # useful fused output width per pixel

    # ---- packed-output geometry: G pixels per 128-lane row (lane-dense, no zero lanes)
    if c2 <= 128:
        cg = pl.next_power_of_2(c2)         # per-pixel group width, divides 128
        G = 128 // cg
        CP = 128
    else:
        cg = _round_up(c2, 128)
        G = 1
        CP = cg
    Kg = G * K2                             # contraction depth per packed row

    cdt = jnp.dtype(compute_dtype)
    isz = cdt.itemsize

    # ---- fused complex weight [[Wr, Wi], [-Wi, Wr]] : (K2, c2), rows (kh, kw, [r|i], ci)
    wr_t = jnp.transpose(w_r, (2, 3, 1, 0))             # (KH, KW, C_in, C_out)
    wi_t = jnp.transpose(w_i, (2, 3, 1, 0))
    w_from_real = jnp.concatenate([wr_t, wi_t], axis=-1)   # fed by real input channels
    w_from_imag = jnp.concatenate([-wi_t, wr_t], axis=-1)  # fed by imag input channels
    w_fused = jnp.concatenate([w_from_real, w_from_imag], axis=2).reshape(K2, c2)
    if cg > c2:
        w_fused = jnp.pad(w_fused, ((0, 0), (0, cg - c2)))
    # Block-diagonal: each packed pixel sees its own copy of the weight, so the matmul
    # itself emits the packed 128-lane output rows (no in-kernel lane shuffle needed).
    w_big = jnp.kron(jnp.eye(G, dtype=w_fused.dtype), w_fused).astype(cdt)   # (Kg, CP)

    # ---- fused bias (br - bi | br + bi), tiled per packed pixel, zero in pad lanes
    b_row = jnp.concatenate([b_r - b_i, b_r + b_i]).astype(jnp.float32)
    if cg > c2:
        b_row = jnp.pad(b_row, (0, cg - c2))
    b_big = jnp.tile(b_row.reshape(1, cg), (1, G))                           # (1, CP)

    # ---- wrapper-side im2col over VALID output pixels only (stride folded in)
    xr = jnp.transpose(x_real, (0, 2, 3, 1))
    xi = jnp.transpose(x_imag, (0, 2, 3, 1))
    x_cat = jnp.concatenate([xr, xi], axis=-1)            # (N, H, W, 2*C_in)
    cols = []
    for kh in range(KH):
        for kw in range(KW):
            cols.append(x_cat[:, kh:kh + stride * (H_out - 1) + 1:stride,
                                 kw:kw + stride * (W_out - 1) + 1:stride, :])
    patches = jnp.concatenate(cols, axis=-1).reshape(N, M, K2).astype(cdt)

    # ---- pack G pixels per row; pad packed-row count to a tile multiple
    Mp = pl.cdiv(M, G)
    tile_rows = max(8, min(_round_up(int(tile_rows), 8), _round_up(Mp, 8)))
    Kg_pad = _round_up(Kg, 128)             # VMEM lane padding of the LHS block
    # keep the double-buffered LHS block <= ~12 MiB of (lane-padded) VMEM
    while tile_rows > 8 and 2 * tile_rows * Kg_pad * isz > (12 << 20):
        tile_rows = max(8, _round_up(tile_rows // 2, 8))
    Mp_pad = _round_up(Mp, tile_rows)
    patches = jnp.pad(patches, ((0, 0), (0, Mp_pad * G - M), (0, 0)))
    lhs = patches.reshape(N, Mp_pad, Kg)    # free row-major repack: G pixels per row

    grid = (N, Mp_pad // tile_rows)

    # ---- VMEM budget: lane-padded widths, sublane-rounded rows, double buffering
    need = (2 * tile_rows * Kg_pad * isz            # lhs blocks (double-buffered)
            + 2 * _round_up(Kg, 8) * CP * isz       # fused weight (counted 2x for safety)
            + 2 * 8 * CP * 4                        # bias row (sublane-padded)
            + 2 * tile_rows * CP * 4                # output blocks (double-buffered)
            + 2 * tile_rows * CP * 4)               # matmul accumulator / temporaries
    vmem_limit = int(min(max(need + need // 4 + (2 << 20), 8 << 20), 48 << 20))

    out = pl.pallas_call(
        _matmul_bias_kernel,
        out_shape=jax.ShapeDtypeStruct((N, Mp_pad, CP), jnp.float32),
        grid=grid,
        in_specs=[
            pl.BlockSpec((None, tile_rows, Kg), lambda n, i: (n, i, 0)),
            pl.BlockSpec((Kg, CP), lambda n, i: (0, 0)),
            pl.BlockSpec((1, CP), lambda n, i: (0, 0)),
        ],
        out_specs=pl.BlockSpec((None, tile_rows, CP), lambda n, i: (n, i, 0)),
        compiler_params=pltpu.CompilerParams(
            dimension_semantics=("parallel", "parallel"),
            vmem_limit_bytes=vmem_limit),
    )(lhs, w_big, b_big)

    # ---- epilogue reads only useful bytes: un-packing is a free row-major reshape
    y = out.reshape(N, Mp_pad * G, cg)[:, :M, :c2].reshape(N, H_out, W_out, c2)
    y_r = jnp.transpose(y[..., :C_out], (0, 3, 1, 2))
    y_i = jnp.transpose(y[..., C_out:c2], (0, 3, 1, 2))
    return (y_r + 1j * y_i).astype(jnp.complex64)


def _ref_conv(x, w, b):
    y = jax.lax.conv_general_dilated(
        x, w, window_strides=(1, 1), padding="VALID",
        dimension_numbers=("NCHW", "OIHW", "NCHW"))
    return y + b.reshape(1, -1, 1, 1)


if __name__ == "__main__":
    key = jax.random.PRNGKey(0)
    # Module-implied shapes: complex NCHW input, Conv2d(in=4, out=8, k=3).
    N, C_in, H, W = 2, 4, 16, 16
    C_out, KH, KW = 8, 3, 3

    k_xr, k_xi, k_wr, k_wi, k_br, k_bi = jax.random.split(key, 6)
    x_real = jax.random.normal(k_xr, (N, C_in, H, W), dtype=jnp.float32)
    x_imag = jax.random.normal(k_xi, (N, C_in, H, W), dtype=jnp.float32)

    fan_in = C_in * KH * KW
    bound = 1.0 / (fan_in ** 0.5)
    w_r = jax.random.uniform(k_wr, (C_out, C_in, KH, KW), jnp.float32, -bound, bound)
    w_i = jax.random.uniform(k_wi, (C_out, C_in, KH, KW), jnp.float32, -bound, bound)
    b_r = jax.random.uniform(k_br, (C_out,), jnp.float32, -bound, bound)
    b_i = jax.random.uniform(k_bi, (C_out,), jnp.float32, -bound, bound)

    # Pure-JAX reference (apply_complex with real convs).
    ref = ((_ref_conv(x_real, w_r, b_r) - _ref_conv(x_imag, w_i, b_i))
           + 1j * (_ref_conv(x_imag, w_r, b_r) + _ref_conv(x_real, w_i, b_i))
           ).astype(jnp.complex64)

    # Default config (single packed-row tile at this toy size), f32 operands.
    out = jax.block_until_ready(
        complex_conv2d(x_real, x_imag, w_r, w_i, b_r, b_i))
    assert out.shape == (N, C_out, H - KH + 1, W - KW + 1)
    assert out.dtype == jnp.complex64
    assert jnp.allclose(out.real, ref.real, atol=1e-4, rtol=1e-4)
    assert jnp.allclose(out.imag, ref.imag, atol=1e-4, rtol=1e-4)

    # Small-tile config: exercises the multi-tile M grid / pipelined path.
    out_t = jax.block_until_ready(
        complex_conv2d(x_real, x_imag, w_r, w_i, b_r, b_i, tile_rows=8))
    assert jnp.allclose(out_t.real, ref.real, atol=1e-4, rtol=1e-4)
    assert jnp.allclose(out_t.imag, ref.imag, atol=1e-4, rtol=1e-4)

    # bf16 operand path (f32 accumulation) for v6e/v7x MXU throughput.
    out_bf = jax.block_until_ready(
        complex_conv2d(x_real, x_imag, w_r, w_i, b_r, b_i,
                       compute_dtype=jnp.bfloat16))
    assert jnp.allclose(out_bf.real, ref.real, atol=1e-1, rtol=5e-2)
    assert jnp.allclose(out_bf.imag, ref.imag, atol=1e-1, rtol=5e-2)

    print("KERNEL_OK")
</pallas_src>

<mosaic_0001>
module attributes {stable_mosaic.version = 11 : i64} {
  func.func @_matmul_bias_kernel(%arg0: i32, %arg1: i32, %arg2: memref<1x32x576xf32, #tpu.memory_space<vmem>>, %arg3: memref<576x128xf32, #tpu.memory_space<vmem>>, %arg4: memref<1x128xf32, #tpu.memory_space<vmem>>, %arg5: memref<1x32x128xf32, #tpu.memory_space<vmem>>) attributes {dimension_semantics = [#tpu.dimension_semantics<parallel>, #tpu.dimension_semantics<parallel>], iteration_bounds = array<i64: 2, 1>, scalar_prefetch = 0 : i64, scratch_operands = 0 : i64, tpu.core_type = #tpu.core_type<tc>, window_params = [{transform_indices = @transform_0, window_bounds = array<i64: 1, 32, 576>}, {pipeline_mode = #tpu.pipeline_mode<synchronous>, transform_indices = @transform_1, window_bounds = array<i64: 576, 128>}, {pipeline_mode = #tpu.pipeline_mode<synchronous>, transform_indices = @transform_2, window_bounds = array<i64: 1, 128>}, {transform_indices = @transform_3, window_bounds = array<i64: 1, 32, 128>}]} {
    %c0 = arith.constant 0 : index
    %c0_0 = arith.constant 0 : index
    %c0_1 = arith.constant 0 : index
    %0 = vector.load %arg2[%c0, %c0_0, %c0_1] : memref<1x32x576xf32, #tpu.memory_space<vmem>>, vector<1x32x576xf32>
    %1 = vector.shape_cast %0 : vector<1x32x576xf32> to vector<32x576xf32>
    %c0_2 = arith.constant 0 : index
    %c0_3 = arith.constant 0 : index
    %2 = vector.load %arg3[%c0_2, %c0_3] : memref<576x128xf32, #tpu.memory_space<vmem>>, vector<576x128xf32>
    %cst = arith.constant dense<0.000000e+00> : vector<32x128xf32>
    %3 = tpu.matmul %1, %2, %cst {dimension_numbers = #tpu.dot_dimension_numbers<[1], [0], [0], [1], [0, 0, 1, 1], [], []>} : vector<32x576xf32>, vector<576x128xf32>, vector<32x128xf32> -> vector<32x128xf32>
    %c0_4 = arith.constant 0 : index
    %c0_5 = arith.constant 0 : index
    %4 = vector.load %arg4[%c0_4, %c0_5] : memref<1x128xf32, #tpu.memory_space<vmem>>, vector<1x128xf32>
    %5 = vector.broadcast %4 : vector<1x128xf32> to vector<32x128xf32>
    %6 = arith.addf %3, %5 : vector<32x128xf32>
    %c0_6 = arith.constant 0 : index
    %c0_7 = arith.constant 0 : index
    %c0_8 = arith.constant 0 : index
    %7 = vector.load %arg5[%c0_6, %c0_7, %c0_8] : memref<1x32x128xf32, #tpu.memory_space<vmem>>, vector<1x32x128xf32>
    %8 = vector.shape_cast %7 : vector<1x32x128xf32> to vector<32x128xf32>
    %9 = vector.shape_cast %6 : vector<32x128xf32> to vector<1x32x128xf32>
    tpu.vector_store %arg5[%c0_6, %c0_7, %c0_8], %9 {strides = array<i32>} : memref<1x32x128xf32, #tpu.memory_space<vmem>>, vector<1x32x128xf32>,
    return
  }
  func.func @transform_0(%arg0: i32, %arg1: i32) -> (i32, i32, i32) {
    %c0_i32 = arith.constant 0 : i32
    %c0_i32_0 = arith.constant 0 : i32
    return %arg0, %arg1, %c0_i32 : i32, i32, i32
  }
  func.func @transform_1(%arg0: i32, %arg1: i32) -> (i32, i32) {
    %c0_i32 = arith.constant 0 : i32
    %c0_i32_0 = arith.constant 0 : i32
    %c0_i32_1 = arith.constant 0 : i32
    return %c0_i32, %c0_i32_0 : i32, i32
  }
  func.func @transform_2(%arg0: i32, %arg1: i32) -> (i32, i32) {
    %c0_i32 = arith.constant 0 : i32
    %c0_i32_0 = arith.constant 0 : i32
    %c0_i32_1 = arith.constant 0 : i32
    return %c0_i32, %c0_i32_0 : i32, i32
  }
  func.func @transform_3(%arg0: i32, %arg1: i32) -> (i32, i32, i32) {
    %c0_i32 = arith.constant 0 : i32
    %c0_i32_0 = arith.constant 0 : i32
    return %arg0, %arg1, %c0_i32 : i32, i32, i32
  }
}

</mosaic_0001>

<llo_original>
// kernel: tpu_custom_call.1
$region0: #{tpu_custom_call.1}
  #allocation0 [shape = 'u32[]', space=smem, size = 0x4, offset = 0x4, fixed_abs, tag = 'smem constant byte address 0x4 - core index']
  #allocation1 [shape = 'u32[144,128]{1,0:T(1,128)}', space=vmem, size = 0x12000, scoped, tag = 'internal scratch']
  %s0 = inlined_call_operand.hbm [shape: f32[2,32,576], index: 0, kind: input, shape index: {}]
  %s1 = inlined_call_operand.hbm [shape: f32[576,128], index: 1, kind: input, shape index: {}]
  %s2 = inlined_call_operand.vmem [shape: f32[1,128], index: 2, kind: input, shape index: {}]
  %s3 = inlined_call_operand.hbm [shape: f32[2,32,128], index: 3, kind: output, shape index: {}]
  %s4 = sld [smem:[#allocation0]]
  $region53: #{tpu_custom_call.1} parent=0
    _
  %s6 = ssub.s32 1, %s4
  %s7 = scalar_select 0, %s6, %s4
  $region1: #{tpu_custom_call.1} parent=0
    #allocation2 [shape = 'u8[163840]{0}', space=vmem, size = 0x28000, scoped, tag = 'input window, operand 0']
    #allocation3 [shape = 's32[2]{0}', space=sflag, size = 0x8, scoped, tag = 'scoped memory for tpu_custom_call.1']
    #allocation4 [shape = 's32[2]{0}', space=sflag, size = 0x8, scoped, tag = 'scoped memory for tpu_custom_call.1']
    #allocation5 [shape = 'u8[294912]{0}', space=vmem, size = 0x48000, scoped, tag = 'input window, operand 1, single buffered']
    #allocation6 [shape = 's32[1]{0}', space=sflag, size = 0x4, scoped, tag = 'scoped memory for tpu_custom_call.1']
    #allocation7 [shape = 'u8[32768]{0}', space=vmem, size = 0x8000, scoped, tag = 'output window, operand 0']
    %8 = vsyncpa [#allocation3], 0
    %s9 = scalar_lea.sflag [#allocation3], 1
    %10 = vsyncpa %s9, 0
    %11 = vsyncpa [#allocation6], 0
    %12 = vsyncpa [#allocation4], 0
    %s13 = scalar_lea.sflag [#allocation4], 1
    %14 = vsyncpa %s13, 0
    loop: start=0, step=1, limit=4
    $region2: #{tpu_custom_call.1} parent=1 // loop_pre_header
      _
    $region3: #{tpu_custom_call.1} parent=1 // loop_header
      %s16 = sphi 0, %s20
      %p17 = scmp.ge.s32.totalorder %s16, 4
      %s23 = sphi 0, %s35
      %s24 = sphi 0, %s31
      %s25 = sphi 0, %s23
      %s26 = sphi 0, %s24
      %s27 = sphi 0, %s25
      %s28 = sphi 0, %s26
      %s40 = sphi 0, %s42
      %s43 = sphi 0, %s40
      %s44 = sphi 0, %s43
      %s60 = sphi 0, %s44
      %s64 = sphi 0, %s64
      %s66 = sphi 0, %s64
      %s67 = sphi 0, %s66
      %s81 = sphi 0, %s67
      %s85 = sphi 0, %s85
      %s87 = sphi 0, %s85
      %s88 = sphi 0, %s87
      %s102 = sphi 0, %s88
      %s110 = sphi 0, %s112
      %s113 = sphi 0, %s110
      %s114 = sphi 0, %s113
      %s130 = sphi 0, %s114
    $region4: #{tpu_custom_call.1} parent=1 // loop_header_branch
      %19 = sbr.rel (%p17) target = $region8
    $region5: #{tpu_custom_call.1} parent=1 // loop_body
      %s21 = ssub.s32 %s16, 1
      %s22 = ssub.s32 %s16, 2
      %s29 = sadd.s32 1, %s24
      %p30 = scmp.ge.s32.totalorder %s29, 1
      %s31 = scalar_select %p30, 0, %s29
      %s32 = sadd.s32 1, %s23
      %s33 = scalar_select %p30, %s32, %s23
      %p34 = scmp.ge.s32.totalorder %s33, 2
      %s35 = scalar_select %p34, 0, %s33
      %s36 = ssub.s32 %s23, %s35
      %s37 = ssub.s32 %s24, %s31
      %s38 = sor.u32 %s36, %s37
      %p39 = scmp.eq.s32.totalorder %s38, 0
      %s41 = sadd.s32 %s40, 1
      %s42 = scalar_select %p39, %s40, %s41
      %p45 = pneg %p39
      %p46 = scmp.eq.s32.totalorder %s16, 1
      %p47 = por %p45, %p46
      %p48 = scmp.ne.s32.totalorder %s40, %s43
      %p49 = scmp.eq.s32.totalorder %s16, 0
      %p50 = por %p48, %p49
      %p51 = scmp.ne.s32.totalorder %s40, %s43
      %p52 = scmp.eq.s32.totalorder %s21, 1
      %p53 = por %p51, %p52
      %p54 = scmp.ne.s32.totalorder %s43, %s44
      %p55 = scmp.eq.s32.totalorder %s21, 0
      %p56 = por %p54, %p55
      %p57 = scmp.ne.s32.totalorder %s43, %s44
      %p58 = scmp.eq.s32.totalorder %s22, 1
      %p59 = por %p57, %p58
      %p61 = scmp.ne.s32.totalorder %s44, %s60
      %p62 = scmp.eq.s32.totalorder %s22, 0
      %p63 = por %p61, %p62
      %s65 = sadd.s32 %s64, 1
      %p68 = scmp.eq.s32.totalorder %s16, 1
      %p69 = scmp.ne.s32.totalorder %s64, %s66
      %p70 = scmp.eq.s32.totalorder %s16, 0
      %p71 = por %p69, %p70
      %p72 = scmp.ne.s32.totalorder %s64, %s66
      %p73 = scmp.eq.s32.totalorder %s21, 1
      %p74 = por %p72, %p73
      %p75 = scmp.ne.s32.totalorder %s66, %s67
      %p76 = scmp.eq.s32.totalorder %s21, 0
      %p77 = por %p75, %p76
      %p78 = scmp.ne.s32.totalorder %s66, %s67
      %p79 = scmp.eq.s32.totalorder %s22, 1
      %p80 = por %p78, %p79
      %p82 = scmp.ne.s32.totalorder %s67, %s81
      %p83 = scmp.eq.s32.totalorder %s22, 0
      %p84 = por %p82, %p83
      %s86 = sadd.s32 %s85, 1
      %p89 = scmp.eq.s32.totalorder %s16, 1
      %p90 = scmp.ne.s32.totalorder %s85, %s87
      %p91 = scmp.eq.s32.totalorder %s16, 0
      %p92 = por %p90, %p91
      %p93 = scmp.ne.s32.totalorder %s85, %s87
      %p94 = scmp.eq.s32.totalorder %s21, 1
      %p95 = por %p93, %p94
      %p96 = scmp.ne.s32.totalorder %s87, %s88
      %p97 = scmp.eq.s32.totalorder %s21, 0
      %p98 = por %p96, %p97
      %p99 = scmp.ne.s32.totalorder %s87, %s88
      %p100 = scmp.eq.s32.totalorder %s22, 1
      %p101 = por %p99, %p100
      %p103 = scmp.ne.s32.totalorder %s88, %s102
      %p104 = scmp.eq.s32.totalorder %s22, 0
      %p105 = por %p103, %p104
      %s106 = ssub.s32 %s23, %s35
      %s107 = ssub.s32 %s24, %s31
      %s108 = sor.u32 %s106, %s107
      %p109 = scmp.eq.s32.totalorder %s108, 0
      %s111 = sadd.s32 %s110, 1
      %s112 = scalar_select %p109, %s110, %s111
      %p115 = pneg %p109
      %p116 = scmp.eq.s32.totalorder %s16, 1
      %p117 = por %p115, %p116
      %p118 = scmp.ne.s32.totalorder %s110, %s113
      %p119 = scmp.eq.s32.totalorder %s16, 0
      %p120 = por %p118, %p119
      %p121 = scmp.ne.s32.totalorder %s110, %s113
      %p122 = scmp.eq.s32.totalorder %s21, 1
      %p123 = por %p121, %p122
      %p124 = scmp.ne.s32.totalorder %s113, %s114
      %p125 = scmp.eq.s32.totalorder %s21, 0
      %p126 = por %p124, %p125
      %p127 = scmp.ne.s32.totalorder %s113, %s114
      %p128 = scmp.eq.s32.totalorder %s22, 1
      %p129 = por %p127, %p128
      %p131 = scmp.ne.s32.totalorder %s114, %s130
      %p132 = scmp.eq.s32.totalorder %s22, 0
      %p133 = por %p131, %p132
      %p134 = scmp.le.s32.totalorder 1, %s16
      %p135 = scmp.lt.s32.totalorder %s16, 3
      %p136 = pnand %p134, %p135
      %p137 = pneg %p136
      // Predicated region
      $region9: #{tpu_custom_call.1} parent=5 // pred_check
        _
      $region10: #{tpu_custom_call.1} parent=5 // pred_check_branch
        %139 = sbr.rel (%p136) target = $region12
      $region11: #{tpu_custom_call.1} parent=5 // pred_region
        %s140 = ssub.s32 %s16, 1
        // Predicated region
        $region13: #{tpu_custom_call.1} parent=11 // pred_check
          %p141 = pneg %p77
        $region14: #{tpu_custom_call.1} parent=11 // pred_check_branch
          %143 = sbr.rel (%p141) target = $region16
        $region15: #{tpu_custom_call.1} parent=11 // pred_region
          %s145 = ssub.s32 9216, 9216
          %146 = vsyncadd [#allocation6], %s145
          %s147 = sshll.u32 [#allocation5], 4
          %s148 = int_to_ptr.vmem [resolvable:$true] %s147
          %153 = dma.hbm_to_vmem [thread:$0]  %s1, 9216, %s148, [#allocation6], 128, 128, 8
        $region16: #{tpu_custom_call.1} parent=11 // pred_fallthru
          _
        // Predicated region
        $region17: #{tpu_custom_call.1} parent=11 // pred_check
          %p154 = pneg %p98
        $region18: #{tpu_custom_call.1} parent=11 // pred_check_branch
          %156 = sbr.rel (%p154) target = $region20
        $region19: #{tpu_custom_call.1} parent=11 // pred_region
          _
        $region20: #{tpu_custom_call.1} parent=11 // pred_fallthru
          _
      $region12: #{tpu_custom_call.1} parent=5 // pred_fallthru
        _
      %p157 = scmp.lt.s32.totalorder %s16, 2
      // Predicated region
      $region21: #{tpu_custom_call.1} parent=5 // pred_check
        %p158 = pneg %p157
      $region22: #{tpu_custom_call.1} parent=5 // pred_check_branch
        %160 = sbr.rel (%p158) target = $region24
      $region23: #{tpu_custom_call.1} parent=5 // pred_region
        // Predicated region
        $region25: #{tpu_custom_call.1} parent=23 // pred_check
          %p161 = pneg %p50
        $region26: #{tpu_custom_call.1} parent=23 // pred_check_branch
          %163 = sbr.rel (%p161) target = $region28
        $region27: #{tpu_custom_call.1} parent=23 // pred_region
          %s164 = sand.u32 %s40, 1
          %s165 = scalar_lea.sflag [#allocation3], %s164
          %s166 = sand.u32 %s40, 1
          %s167 = smul.addr %s166, 160
          %s168 = scalar_lea.vmem [#allocation2], %s167
          %s169 = smul.u32 4, %s24
          %s171 = ssub.s32 2560, 2560
          %172 = vsyncadd %s165, %s171
          %s173 = smul.addr %s169, 5
          %s174 = smul.addr %s23, 20
          %s175 = sadd.s32 %s173, %s174
          %s176 = smul.addr %s175, 128
          %s177 = scalar_lea.hbm %s0, %s176
          %s178 = sshll.u32 %s168, 4
          %s179 = int_to_ptr.vmem [resolvable:$true] %s178
          %184 = dma.hbm_to_vmem [thread:$0]  %s177, 2560, %s179, %s165, 640, 640, 40
        $region28: #{tpu_custom_call.1} parent=23 // pred_fallthru
          _
      $region24: #{tpu_custom_call.1} parent=5 // pred_fallthru
        _
      %p185 = scmp.le.s32.totalorder 1, %s16
      %p186 = scmp.lt.s32.totalorder %s16, 3
      %p187 = pnand %p185, %p186
      %p188 = pneg %p187
      // Predicated region
      $region29: #{tpu_custom_call.1} parent=5 // pred_check
        _
      $region30: #{tpu_custom_call.1} parent=5 // pred_check_branch
        %190 = sbr.rel (%p187) target = $region32
      $region31: #{tpu_custom_call.1} parent=5 // pred_region
        %s191 = ssub.s32 %s16, 1
        %s192 = sand.u32 %s43, 1
        %s193 = scalar_lea.sflag [#allocation3], %s192
        %s194 = sand.u32 %s43, 1
        %s195 = smul.addr %s194, 160
        %s196 = scalar_lea.vmem [#allocation2], %s195
        // Predicated region
        $region33: #{tpu_custom_call.1} parent=31 // pred_check
          %p197 = pneg %p56
        $region34: #{tpu_custom_call.1} parent=31 // pred_check_branch
          %199 = sbr.rel (%p197) target = $region36
        $region35: #{tpu_custom_call.1} parent=31 // pred_region
          %200 = dma.done %s193, 2560
        $region36: #{tpu_custom_call.1} parent=31 // pred_fallthru
          _
        // Predicated region
        $region37: #{tpu_custom_call.1} parent=31 // pred_check
          %p201 = pneg %p77
        $region38: #{tpu_custom_call.1} parent=31 // pred_check_branch
          %203 = sbr.rel (%p201) target = $region40
        $region39: #{tpu_custom_call.1} parent=31 // pred_region
          %204 = dma.done [#allocation6], 9216
        $region40: #{tpu_custom_call.1} parent=31 // pred_fallthru
          _
        %s205 = sand.u32 %s43, 1
        %s206 = scalar_lea.sflag [#allocation3], %s205
        %s207 = sand.u32 %s43, 1
        %s208 = smul.addr %s207, 160
        %s209 = scalar_lea.vmem [#allocation2], %s208
        %p210 = pneg %p56
        %p211 = pneg %p53
        %p212 = pneg %p77
        %p213 = pneg %p74
        %p214 = pneg %p98
        %p215 = pneg %p95
        %p216 = pneg %p126
        %p217 = pneg %p123
        %s218 = sand.u32 %s113, 1
        %s219 = scalar_lea.sflag [#allocation4], %s218
        %s220 = sand.u32 %s113, 1
        %s221 = smul.addr %s220, 32
        %s222 = scalar_lea.vmem [#allocation7], %s221
        %s223 = smul.u32 4, %s26
        %s224 = smul.u32 4, %s26
        %v225 = vld [vmem:[%s196] sm:$0xff]
        %v226 = vld [vmem:[%s196 + $0x8] sm:$0xff]
        %v227 = vld [vmem:[%s196 + $0x10] sm:$0xff]
        %v228 = vld [vmem:[%s196 + $0x18] sm:$0xff]
        %v229 = vld [vmem:[%s196 + $0x20] sm:$0xff]
        %v230 = vld [vmem:[%s196 + $0x28] sm:$0xff]
        %v231 = vld [vmem:[%s196 + $0x30] sm:$0xff]
        %v232 = vld [vmem:[%s196 + $0x38] sm:$0xff]
        %v233 = vld [vmem:[%s196 + $0x40] sm:$0xff]
        %v234 = vld [vmem:[%s196 + $0x48] sm:$0xff]
        %v235 = vld [vmem:[%s196 + $0x50] sm:$0xff]
        %v236 = vld [vmem:[%s196 + $0x58] sm:$0xff]
        %v237 = vld [vmem:[%s196 + $0x60] sm:$0xff]
        %v238 = vld [vmem:[%s196 + $0x68] sm:$0xff]
        %v239 = vld [vmem:[%s196 + $0x70] sm:$0xff]
        %v240 = vld [vmem:[%s196 + $0x78] sm:$0xff]
        %v241 = vld [vmem:[%s196 + $0x80] sm:$0xff]
        %v242 = vld [vmem:[%s196 + $0x88] sm:$0xff]
        %v243 = vld [vmem:[%s196 + $0x90] sm:$0xff]
        %v244 = vld [vmem:[%s196 + $0x98] sm:$0xff]
        %v245 = vld [vmem:[#allocation5] sm:$0xff]
        %v246 = vld [vmem:[#allocation5 + $0x8] sm:$0xff]
        %v247 = vld [vmem:[#allocation5 + $0x10] sm:$0xff]
        %v248 = vld [vmem:[#allocation5 + $0x18] sm:$0xff]
        %v249 = vld [vmem:[#allocation5 + $0x20] sm:$0xff]
        %v250 = vld [vmem:[#allocation5 + $0x28] sm:$0xff]
        %v251 = vld [vmem:[#allocation5 + $0x30] sm:$0xff]
        %v252 = vld [vmem:[#allocation5 + $0x38] sm:$0xff]
        %v253 = vld [vmem:[#allocation5 + $0x40] sm:$0xff]
        %v254 = vld [vmem:[#allocation5 + $0x48] sm:$0xff]
        %v255 = vld [vmem:[#allocation5 + $0x50] sm:$0xff]
        %v256 = vld [vmem:[#allocation5 + $0x58] sm:$0xff]
        %v257 = vld [vmem:[#allocation5 + $0x60] sm:$0xff]
        %v258 = vld [vmem:[#allocation5 + $0x68] sm:$0xff]
        %v259 = vld [vmem:[#allocation5 + $0x70] sm:$0xff]
        %v260 = vld [vmem:[#allocation5 + $0x78] sm:$0xff]
        %v261 = vld [vmem:[#allocation5 + $0x80] sm:$0xff]
        %v262 = vld [vmem:[#allocation5 + $0x88] sm:$0xff]
        %v263 = vld [vmem:[#allocation5 + $0x90] sm:$0xff]
        %v264 = vld [vmem:[#allocation5 + $0x98] sm:$0xff]
        %v265 = vld [vmem:[#allocation5 + $0xa0] sm:$0xff]
        %v266 = vld [vmem:[#allocation5 + $0xa8] sm:$0xff]
        %v267 = vld [vmem:[#allocation5 + $0xb0] sm:$0xff]
        %v268 = vld [vmem:[#allocation5 + $0xb8] sm:$0xff]
        %v269 = vld [vmem:[#allocation5 + $0xc0] sm:$0xff]
        %v270 = vld [vmem:[#allocation5 + $0xc8] sm:$0xff]
        %v271 = vld [vmem:[#allocation5 + $0xd0] sm:$0xff]
        %v272 = vld [vmem:[#allocation5 + $0xd8] sm:$0xff]
        %v273 = vld [vmem:[#allocation5 + $0xe0] sm:$0xff]
        %v274 = vld [vmem:[#allocation5 + $0xe8] sm:$0xff]
        %v275 = vld [vmem:[#allocation5 + $0xf0] sm:$0xff]
        %v276 = vld [vmem:[#allocation5 + $0xf8] sm:$0xff]
        %v277 = vld [vmem:[#allocation5 + $0x100] sm:$0xff]
        %v278 = vld [vmem:[#allocation5 + $0x108] sm:$0xff]
        %v279 = vld [vmem:[#allocation5 + $0x110] sm:$0xff]
        %v280 = vld [vmem:[#allocation5 + $0x118] sm:$0xff]
        %v281 = vld [vmem:[#allocation5 + $0x120] sm:$0xff]
        %v282 = vld [vmem:[#allocation5 + $0x128] sm:$0xff]
        %v283 = vld [vmem:[#allocation5 + $0x130] sm:$0xff]
        %v284 = vld [vmem:[#allocation5 + $0x138] sm:$0xff]
        %v285 = vld [vmem:[#allocation5 + $0x140] sm:$0xff]
        %v286 = vld [vmem:[#allocation5 + $0x148] sm:$0xff]
        %v287 = vld [vmem:[#allocation5 + $0x150] sm:$0xff]
        %v288 = vld [vmem:[#allocation5 + $0x158] sm:$0xff]
        %v289 = vld [vmem:[#allocation5 + $0x160] sm:$0xff]
        %v290 = vld [vmem:[#allocation5 + $0x168] sm:$0xff]
        %v291 = vld [vmem:[#allocation5 + $0x170] sm:$0xff]
        %v292 = vld [vmem:[#allocation5 + $0x178] sm:$0xff]
        %v293 = vld [vmem:[#allocation5 + $0x180] sm:$0xff]
        %v294 = vld [vmem:[#allocation5 + $0x188] sm:$0xff]
        %v295 = vld [vmem:[#allocation5 + $0x190] sm:$0xff]
        %v296 = vld [vmem:[#allocation5 + $0x198] sm:$0xff]
        %v297 = vld [vmem:[#allocation5 + $0x1a0] sm:$0xff]
        %v298 = vld [vmem:[#allocation5 + $0x1a8] sm:$0xff]
        %v299 = vld [vmem:[#allocation5 + $0x1b0] sm:$0xff]
        %v300 = vld [vmem:[#allocation5 + $0x1b8] sm:$0xff]
        %v301 = vld [vmem:[#allocation5 + $0x1c0] sm:$0xff]
        %v302 = vld [vmem:[#allocation5 + $0x1c8] sm:$0xff]
        %v303 = vld [vmem:[#allocation5 + $0x1d0] sm:$0xff]
        %v304 = vld [vmem:[#allocation5 + $0x1d8] sm:$0xff]
        %v305 = vld [vmem:[#allocation5 + $0x1e0] sm:$0xff]
        %v306 = vld [vmem:[#allocation5 + $0x1e8] sm:$0xff]
        %v307 = vld [vmem:[#allocation5 + $0x1f0] sm:$0xff]
        %v308 = vld [vmem:[#allocation5 + $0x1f8] sm:$0xff]
        %v309 = vld [vmem:[#allocation5 + $0x200] sm:$0xff]
        %v310 = vld [vmem:[#allocation5 + $0x208] sm:$0xff]
        %v311 = vld [vmem:[#allocation5 + $0x210] sm:$0xff]
        %v312 = vld [vmem:[#allocation5 + $0x218] sm:$0xff]
        %v313 = vld [vmem:[#allocation5 + $0x220] sm:$0xff]
        %v314 = vld [vmem:[#allocation5 + $0x228] sm:$0xff]
        %v315 = vld [vmem:[#allocation5 + $0x230] sm:$0xff]
        %v316 = vld [vmem:[#allocation5 + $0x238] sm:$0xff]
        %v317 = vld [vmem:[%s2] sm:$0x1]
        %v319 = vlaneseq
        %v320 = vshrl.u32 %v319, 7
        %v321 = vsub.s32 0, %v320
        %v322 = vrot.slane %v317, %v321
        %vm324 = vcmask 523264
        %v326 = vsel %vm324, %v229, 0
        %v329 = vsel %vm324, %v234, 0
        %v332 = vsel %vm324, %v239, 0
        %v335 = vsel %vm324, %v244, 0
        %337 = vmatprep.subr.mxu0 0.0
        %338 = vmatpush1.msra.mxu0 %v260
        %339 = vmatprep.subr.mxu0 0.0
        %340 = vmatpush1.msra.mxu0 %v259
        %341 = vmatprep.subr.mxu0 0.0
        %342 = vmatpush1.msra.mxu0 %v258
        %343 = vmatprep.subr.mxu0 0.0
        %344 = vmatpush1.msra.mxu0 %v257
        %345 = vmatprep.subr.mxu0 0.0
        %346 = vmatpush1.msra.mxu0 %v256
        %347 = vmatprep.subr.mxu0 0.0
        %348 = vmatpush1.msra.mxu0 %v255
        %349 = vmatprep.subr.mxu0 0.0
        %350 = vmatpush1.msra.mxu0 %v254
        %351 = vmatprep.subr.mxu0 0.0
        %352 = vmatpush1.msra.mxu0 %v253
        %353 = vmatprep.subr.mxu0 0.0
        %354 = vmatpush1.msra.mxu0 %v252
        %355 = vmatprep.subr.mxu0 0.0
        %356 = vmatpush1.msra.mxu0 %v251
        %357 = vmatprep.subr.mxu0 0.0
        %358 = vmatpush1.msra.mxu0 %v250
        %359 = vmatprep.subr.mxu0 0.0
        %360 = vmatpush1.msra.mxu0 %v249
        %361 = vmatprep.subr.mxu0 0.0
        %362 = vmatpush1.msra.mxu0 %v248
        %363 = vmatprep.subr.mxu0 0.0
        %364 = vmatpush1.msra.mxu0 %v247
        %365 = vmatprep.subr.mxu0 0.0
        %366 = vmatpush1.msra.mxu0 %v246
        %367 = vmatprep.subr.mxu0 0.0
        %368 = vmatpush1.msra.mxu0 %v245
        %369 = vmatprep.subr.mxu0 0.0
        %370 = vmatpush2.msra.mxu0 %v276
        %371 = vmatprep.subr.mxu0 0.0
        %372 = vmatpush2.msra.mxu0 %v275
        %373 = vmatprep.subr.mxu0 0.0
        %374 = vmatpush2.msra.mxu0 %v274
        %375 = vmatprep.subr.mxu0 0.0
        %376 = vmatpush2.msra.mxu0 %v273
        %377 = vmatprep.subr.mxu0 0.0
        %378 = vmatpush2.msra.mxu0 %v272
        %379 = vmatprep.subr.mxu0 0.0
        %380 = vmatpush2.msra.mxu0 %v271
        %381 = vmatprep.subr.mxu0 0.0
        %382 = vmatpush2.msra.mxu0 %v270
        %383 = vmatprep.subr.mxu0 0.0
        %384 = vmatpush2.msra.mxu0 %v269
        %385 = vmatprep.subr.mxu0 0.0
        %386 = vmatpush2.msra.mxu0 %v268
        %387 = vmatprep.subr.mxu0 0.0
        %388 = vmatpush2.msra.mxu0 %v267
        %389 = vmatprep.subr.mxu0 0.0
        %390 = vmatpush2.msra.mxu0 %v266
        %391 = vmatprep.subr.mxu0 0.0
        %392 = vmatpush2.msra.mxu0 %v265
        %393 = vmatprep.subr.mxu0 0.0
        %394 = vmatpush2.msra.mxu0 %v264
        %395 = vmatprep.subr.mxu0 0.0
        %396 = vmatpush2.msra.mxu0 %v263
        %397 = vmatprep.subr.mxu0 0.0
        %398 = vmatpush2.msra.mxu0 %v262
        %399 = vmatprep.subr.mxu0 0.0
        %400 = vmatpush2.msra.mxu0 %v261
        %401 = vmatprep.mubr.f32.mxu0 %v226
        %402 = vmatmul.mubr.f32.gmra.mxu0 %v225
        %v403 = vpop.f32.mrf.mxu0
        %v404 = vadd.f32 %v322, %v403
        %v405 = vpop.f32.mrf.mxu0
        %406 = vmatprep.mubr.f32.mxu0 %v231
        %407 = vmatmul.mubr.f32.gmra.mxu0 %v230
        %v408 = vpop.f32.mrf.mxu0
        %v409 = vadd.f32 %v322, %v408
        %v410 = vpop.f32.mrf.mxu0
        %411 = vmatprep.mubr.f32.mxu0 %v236
        %412 = vmatmul.mubr.f32.gmra.mxu0 %v235
        %v413 = vpop.f32.mrf.mxu0
        %v414 = vadd.f32 %v322, %v413
        %v415 = vpop.f32.mrf.mxu0
        %416 = vmatprep.mubr.f32.mxu0 %v241
        %417 = vmatmul.mubr.f32.gmra.mxu0 %v240
        %v418 = vpop.f32.mrf.mxu0
        %v419 = vadd.f32 %v322, %v418
        %v420 = vpop.f32.mrf.mxu0
        %421 = vdwg.mxu0
        %422 = vmatprep.subr.mxu0 0.0
        %423 = vmatpush1.msra.mxu0 %v292
        %424 = vmatprep.subr.mxu0 0.0
        %425 = vmatpush1.msra.mxu0 %v291
        %426 = vmatprep.subr.mxu0 0.0
        %427 = vmatpush1.msra.mxu0 %v290
        %428 = vmatprep.subr.mxu0 0.0
        %429 = vmatpush1.msra.mxu0 %v289
        %430 = vmatprep.subr.mxu0 0.0
        %431 = vmatpush1.msra.mxu0 %v288
        %432 = vmatprep.subr.mxu0 0.0
        %433 = vmatpush1.msra.mxu0 %v287
        %434 = vmatprep.subr.mxu0 0.0
        %435 = vmatpush1.msra.mxu0 %v286
        %436 = vmatprep.subr.mxu0 0.0
        %437 = vmatpush1.msra.mxu0 %v285
        %438 = vmatprep.subr.mxu0 0.0
        %439 = vmatpush1.msra.mxu0 %v284
        %440 = vmatprep.subr.mxu0 0.0
        %441 = vmatpush1.msra.mxu0 %v283
        %442 = vmatprep.subr.mxu0 0.0
        %443 = vmatpush1.msra.mxu0 %v282
        %444 = vmatprep.subr.mxu0 0.0
        %445 = vmatpush1.msra.mxu0 %v281
        %446 = vmatprep.subr.mxu0 0.0
        %447 = vmatpush1.msra.mxu0 %v280
        %448 = vmatprep.subr.mxu0 0.0
        %449 = vmatpush1.msra.mxu0 %v279
        %450 = vmatprep.subr.mxu0 0.0
        %451 = vmatpush1.msra.mxu0 %v278
        %452 = vmatprep.subr.mxu0 0.0
        %453 = vmatpush1.msra.mxu0 %v277
        %454 = vmatprep.subr.mxu0 0.0
        %455 = vmatpush2.msra.mxu0 %v308
        %456 = vmatprep.subr.mxu0 0.0
        %457 = vmatpush2.msra.mxu0 %v307
        %458 = vmatprep.subr.mxu0 0.0
        %459 = vmatpush2.msra.mxu0 %v306
        %460 = vmatprep.subr.mxu0 0.0
        %461 = vmatpush2.msra.mxu0 %v305
        %462 = vmatprep.subr.mxu0 0.0
        %463 = vmatpush2.msra.mxu0 %v304
        %464 = vmatprep.subr.mxu0 0.0
        %465 = vmatpush2.msra.mxu0 %v303
        %466 = vmatprep.subr.mxu0 0.0
        %467 = vmatpush2.msra.mxu0 %v302
        %468 = vmatprep.subr.mxu0 0.0
        %469 = vmatpush2.msra.mxu0 %v301
        %470 = vmatprep.subr.mxu0 0.0
        %471 = vmatpush2.msra.mxu0 %v300
        %472 = vmatprep.subr.mxu0 0.0
        %473 = vmatpush2.msra.mxu0 %v299
        %474 = vmatprep.subr.mxu0 0.0
        %475 = vmatpush2.msra.mxu0 %v298
        %476 = vmatprep.subr.mxu0 0.0
        %477 = vmatpush2.msra.mxu0 %v297
        %478 = vmatprep.subr.mxu0 0.0
        %479 = vmatpush2.msra.mxu0 %v296
        %480 = vmatprep.subr.mxu0 0.0
        %481 = vmatpush2.msra.mxu0 %v295
        %482 = vmatprep.subr.mxu0 0.0
        %483 = vmatpush2.msra.mxu0 %v294
        %484 = vmatprep.subr.mxu0 0.0
        %485 = vmatpush2.msra.mxu0 %v293
        %486 = vmatprep.mubr.f32.mxu0 %v228
        %487 = vmatmul.mubr.f32.gmra.mxu0 %v227
        %v488 = vpop.f32.mrf.mxu0
        %v489 = vadd.f32 %v404, %v488
        %v490 = vpop.f32.mrf.mxu0
        %491 = vmatprep.mubr.f32.mxu0 %v233
        %492 = vmatmul.mubr.f32.gmra.mxu0 %v232
        %v493 = vpop.f32.mrf.mxu0
        %v494 = vadd.f32 %v409, %v493
        %v495 = vpop.f32.mrf.mxu0
        %496 = vmatprep.mubr.f32.mxu0 %v238
        %497 = vmatmul.mubr.f32.gmra.mxu0 %v237
        %v498 = vpop.f32.mrf.mxu0
        %v499 = vadd.f32 %v414, %v498
        %v500 = vpop.f32.mrf.mxu0
        %501 = vmatprep.mubr.f32.mxu0 %v243
        %502 = vmatmul.mubr.f32.gmra.mxu0 %v242
        %v503 = vpop.f32.mrf.mxu0
        %v504 = vadd.f32 %v419, %v503
        %v505 = vpop.f32.mrf.mxu0
        %506 = vdwg.mxu0
        %507 = vmatprep.subr.mxu0 0.0
        %508 = vmatpush1.msra.mxu0 0.0
        %509 = vmatprep.subr.mxu0 0.0
        %510 = vmatpush1.msra.mxu0 0.0
        %511 = vmatprep.subr.mxu0 0.0
        %512 = vmatpush1.msra.mxu0 0.0
        %513 = vmatprep.subr.mxu0 0.0
        %514 = vmatpush1.msra.mxu0 0.0
        %515 = vmatprep.subr.mxu0 0.0
        %516 = vmatpush1.msra.mxu0 0.0
        %517 = vmatprep.subr.mxu0 0.0
        %518 = vmatpush1.msra.mxu0 0.0
        %519 = vmatprep.subr.mxu0 0.0
        %520 = vmatpush1.msra.mxu0 0.0
        %521 = vmatprep.subr.mxu0 0.0
        %522 = vmatpush1.msra.mxu0 0.0
        %523 = vmatprep.subr.mxu0 0.0
        %524 = vmatpush1.msra.mxu0 %v316
        %525 = vmatprep.subr.mxu0 0.0
        %526 = vmatpush1.msra.mxu0 %v315
        %527 = vmatprep.subr.mxu0 0.0
        %528 = vmatpush1.msra.mxu0 %v314
        %529 = vmatprep.subr.mxu0 0.0
        %530 = vmatpush1.msra.mxu0 %v313
        %531 = vmatprep.subr.mxu0 0.0
        %532 = vmatpush1.msra.mxu0 %v312
        %533 = vmatprep.subr.mxu0 0.0
        %534 = vmatpush1.msra.mxu0 %v311
        %535 = vmatprep.subr.mxu0 0.0
        %536 = vmatpush1.msra.mxu0 %v310
        %537 = vmatprep.subr.mxu0 0.0
        %538 = vmatpush1.msra.mxu0 %v309
        %539 = vmatprep.subr.mxu0 0.0
        %540 = vmatpush2.msra.mxu0 0.0
        %541 = vmatprep.subr.mxu0 0.0
        %542 = vmatpush2.msra.mxu0 0.0
        %543 = vmatprep.subr.mxu0 0.0
        %544 = vmatpush2.msra.mxu0 0.0
        %545 = vmatprep.subr.mxu0 0.0
        %546 = vmatpush2.msra.mxu0 0.0
        %547 = vmatprep.subr.mxu0 0.0
        %548 = vmatpush2.msra.mxu0 0.0
        %549 = vmatprep.subr.mxu0 0.0
        %550 = vmatpush2.msra.mxu0 0.0
        %551 = vmatprep.subr.mxu0 0.0
        %552 = vmatpush2.msra.mxu0 0.0
        %553 = vmatprep.subr.mxu0 0.0
        %554 = vmatpush2.msra.mxu0 0.0
        %555 = vmatprep.subr.mxu0 0.0
        %556 = vmatpush2.msra.mxu0 0.0
        %557 = vmatprep.subr.mxu0 0.0
        %558 = vmatpush2.msra.mxu0 0.0
        %559 = vmatprep.subr.mxu0 0.0
        %560 = vmatpush2.msra.mxu0 0.0
        %561 = vmatprep.subr.mxu0 0.0
        %562 = vmatpush2.msra.mxu0 0.0
        %563 = vmatprep.subr.mxu0 0.0
        %564 = vmatpush2.msra.mxu0 0.0
        %565 = vmatprep.subr.mxu0 0.0
        %566 = vmatpush2.msra.mxu0 0.0
        %567 = vmatprep.subr.mxu0 0.0
        %568 = vmatpush2.msra.mxu0 0.0
        %569 = vmatprep.subr.mxu0 0.0
        %570 = vmatpush2.msra.mxu0 0.0
        %571 = vmatprep.mubr.f32.mxu0 0.0
        %572 = vmatmul.mubr.f32.gmra.mxu0 %v326
        %v573 = vpop.f32.mrf.mxu0
        %v574 = vadd.f32 %v489, %v573
        %v575 = vpop.f32.mrf.mxu0
        %576 = vmatprep.mubr.f32.mxu0 0.0
        %577 = vmatmul.mubr.f32.gmra.mxu0 %v329
        %v578 = vpop.f32.mrf.mxu0
        %v579 = vadd.f32 %v494, %v578
        %v580 = vpop.f32.mrf.mxu0
        %581 = vmatprep.mubr.f32.mxu0 0.0
        %582 = vmatmul.mubr.f32.gmra.mxu0 %v332
        %v583 = vpop.f32.mrf.mxu0
        %v584 = vadd.f32 %v499, %v583
        %v585 = vpop.f32.mrf.mxu0
        %586 = vmatprep.mubr.f32.mxu0 0.0
        %587 = vmatmul.mubr.f32.gmra.mxu0 %v335
        %v588 = vpop.f32.mrf.mxu0
        %v589 = vadd.f32 %v504, %v588
        %v590 = vpop.f32.mrf.mxu0
        %591 = vdwg.mxu0
        %592 = vst [vmem:[%s222] sm:$0xff] %v574
        %593 = vst [vmem:[%s222 + $0x8] sm:$0xff] %v579
        %594 = vst [vmem:[%s222 + $0x10] sm:$0xff] %v584
        %595 = vst [vmem:[%s222 + $0x18] sm:$0xff] %v589
        %s596 = sand.u32 %s113, 1
        %s597 = scalar_lea.sflag [#allocation4], %s596
        %s598 = sand.u32 %s113, 1
        %s599 = smul.addr %s598, 32
        %s600 = scalar_lea.vmem [#allocation7], %s599
        // Predicated region
        $region41: #{tpu_custom_call.1} parent=31 // pred_check
          %p601 = pneg %p123
        $region42: #{tpu_custom_call.1} parent=31 // pred_check_branch
          %603 = sbr.rel (%p601) target = $region44
        $region43: #{tpu_custom_call.1} parent=31 // pred_region
          %s604 = smul.u32 4, %s26
          %s606 = ssub.s32 512, 512
          %607 = vsyncadd %s597, %s606
          %s608 = smul.addr %s25, 4
          %s609 = sadd.s32 %s604, %s608
          %s610 = smul.addr %s609, 128
          %s611 = scalar_lea.hbm %s3, %s610
          %s612 = sshll.u32 %s600, 4
          %s613 = int_to_ptr.vmem [resolvable:$true] %s612
          %618 = dma.vmem_to_hbm [thread:$0]  %s613, 512, %s611, %s597, 128, 128, 8
        $region44: #{tpu_custom_call.1} parent=31 // pred_fallthru
          _
      $region32: #{tpu_custom_call.1} parent=5 // pred_fallthru
        _
      %p619 = scmp.le.s32.totalorder 2, %s16
      // Predicated region
      $region45: #{tpu_custom_call.1} parent=5 // pred_check
        %p620 = pneg %p619
      $region46: #{tpu_custom_call.1} parent=5 // pred_check_branch
        %622 = sbr.rel (%p620) target = $region48
      $region47: #{tpu_custom_call.1} parent=5 // pred_region
        %s623 = ssub.s32 %s16, 2
        // Predicated region
        $region49: #{tpu_custom_call.1} parent=47 // pred_check
          %p624 = pneg %p129
        $region50: #{tpu_custom_call.1} parent=47 // pred_check_branch
          %626 = sbr.rel (%p624) target = $region52
        $region51: #{tpu_custom_call.1} parent=47 // pred_region
          %s627 = sand.u32 %s114, 1
          %s628 = scalar_lea.sflag [#allocation4], %s627
          %s629 = sand.u32 %s114, 1
          %s630 = smul.addr %s629, 32
          %s631 = scalar_lea.vmem [#allocation7], %s630
          %632 = dma.done %s628, 512
        $region52: #{tpu_custom_call.1} parent=47 // pred_fallthru
          _
      $region48: #{tpu_custom_call.1} parent=5 // pred_fallthru
        _
    $region6: #{tpu_custom_call.1} parent=1 // loop_footer
      %s20 = sadd.s32 1, %s16
    $region7: #{tpu_custom_call.1} parent=1 // loop_footer_branch
      %15 = sbr.rel target = $region3
    $region8: #{tpu_custom_call.1} parent=1 // loop_exit
      _
    %633 = vsyncpa [#allocation3], 1
    %s634 = scalar_lea.sflag [#allocation3], 1
    %635 = vsyncpa %s634, 1
    %636 = vsyncpa [#allocation6], 1
    %637 = vsyncpa [#allocation4], 1
    %s638 = scalar_lea.sflag [#allocation4], 1
    %639 = vsyncpa %s638, 1

</llo_original>
